<compile_context>
chip_gen: v7x
topology: tpu7x:2x2x1
jax: 0.10.0
libtpu: 0.0.40
codegen_flags: <defaults>
</compile_context>

<pallas_src>
import functools
import math

import jax
import jax.numpy as jnp
from jax.experimental import pallas as pl
from jax.experimental.pallas import tpu as pltpu


_VMEM_LIMIT_BYTES = 32 * 1024 * 1024   # >= default scoped limit on v5e/v6e/v7x
_VMEM_TILE_BUDGET = 20 * 1024 * 1024   # headroom under the scoped limit


def _round_up(x, m):
    return ((x + m - 1) // m) * m


def _pick_pixel_tile(m_pix, k, cout):
    """Largest pixel tile (multiple of 128, <= 2048) whose double-buffered
    working set fits the VMEM budget (re-derived per shape, so v7x's smaller
    VMEM is respected automatically)."""
    tp = min(2048, _round_up(m_pix, 128))

    def footprint(t):
        return (2 * k * t * 2          # A tile, bf16, double-buffered
                + 2 * cout * t * 4     # output tile, f32, double-buffered
                + 2 * cout * k * 2     # weight tile, bf16, double-buffered
                + 8 * cout * 4)        # scale/shift/sum/sumsq

    while tp > 128 and footprint(tp) > _VMEM_TILE_BUDGET:
        tp = _round_up(tp // 2, 128)
    return tp


# ---------------------------------------------------------------------------
# Pallas kernels
# ---------------------------------------------------------------------------
def _conv_stats_kernel(w_ref, a_ref, sum_ref, sq_ref, *, m_pix):
    """Pass 1: conv tile (pixels on the lane axis) -> per-channel sum and
    sum-of-squares, accumulated across the pixel-tile grid axis."""
    t = pl.program_id(1)
    tp = a_ref.shape[-1]

    # (Cout, K) @ (K, tp) -> (Cout, tp), f32 accumulation on the MXU.
    y = jnp.dot(w_ref[...], a_ref[...], preferred_element_type=jnp.float32)

    # Mask lanes past the true pixel count: the padded part of a partial input
    # block is unspecified and must not pollute the accumulators.
    col = jax.lax.broadcasted_iota(jnp.int32, y.shape, 1) + t * tp
    y = jnp.where(col < m_pix, y, 0.0)

    @pl.when(t == 0)
    def _():
        sum_ref[...] = jnp.zeros_like(sum_ref)
        sq_ref[...] = jnp.zeros_like(sq_ref)

    sum_ref[...] += jnp.sum(y, axis=1, keepdims=True)
    sq_ref[...] += jnp.sum(y * y, axis=1, keepdims=True)


def _conv_bn_relu_kernel(w_ref, a_ref, scale_ref, shift_ref, o_ref):
    """Pass 2: recompute the conv tile, fused folded-BN affine + ReLU.
    Output tile is (Cout, tp) with pixels on lanes -> unmasked stores and an
    output already in (N, Cout, Ho*Wo) order."""
    y = jnp.dot(w_ref[...], a_ref[...], preferred_element_type=jnp.float32)
    o_ref[...] = jnp.maximum(y * scale_ref[...] + shift_ref[...], 0.0)


# ---------------------------------------------------------------------------
# Glue
# ---------------------------------------------------------------------------
def _im2col_kt(x_nchw, kh, kw, stride, padding):
    """(N,C,H,W) -> (N, C*kh*kw, Ho*Wo): K on sublanes, pixels on lanes.
    For the module default 1x1/s1/p0 this is a free reshape (no copy)."""
    n, c, h, w = x_nchw.shape
    if kh == 1 and kw == 1 and stride == 1 and padding == 0:
        return x_nchw.reshape(n, c, h * w), h, w
    # TODO(synk): for kh*kw > 1 stream shifted windows in-kernel via an extra
    # reduction grid axis instead of materializing the kh*kw-larger im2col.
    xp = jnp.pad(x_nchw, ((0, 0), (0, 0), (padding, padding), (padding, padding)))
    hp, wp = h + 2 * padding, w + 2 * padding
    ho = (hp - kh) // stride + 1
    wo = (wp - kw) // stride + 1
    patches = []
    for i in range(kh):
        for j in range(kw):
            patches.append(xp[:, :, i:i + stride * ho:stride, j:j + stride * wo:stride])
    p = jnp.stack(patches, axis=2)                     # (N, C, kh*kw, Ho, Wo)
    return p.reshape(n, c * kh * kw, ho * wo), ho, wo


def conv_bn_relu(x_nchw, conv_weight, gamma, beta, *, stride=1, padding=0,
                 eps=1e-5, compute_dtype=jnp.bfloat16):
    """x: (N, Cin, H, W) f32.  conv_weight: (Cout, Cin, kh, kw) f32."""
    n, cin, h, w = x_nchw.shape
    cout, _, kh, kw = conv_weight.shape

    a, ho, wo = _im2col_kt(x_nchw, kh, kw, stride, padding)   # (N, K, M)
    k = cin * kh * kw
    m_pix = ho * wo

    # bf16 operands for the MXU (accumulation stays f32 inside the kernels).
    a = a.astype(compute_dtype)
    w_mat = conv_weight.reshape(cout, k).astype(compute_dtype)

    tp = _pick_pixel_tile(m_pix, k, cout)
    num_t = pl.cdiv(m_pix, tp)
    grid = (n, num_t)

    # ---- Pass 1: per-channel sum / sum-of-squares of the conv output -------
    # One (Cout, 1) accumulator pair per image, resident across the pixel-tile
    # axis; batch axis 'parallel' so v7x's two TensorCores get disjoint images.
    # Note: the weight's block index is constant, so it stays resident in the
    # pipeline (for very large K*Cout consider pl.Buffered(1) / VMEM scratch).
    sums, sqs = pl.pallas_call(
        functools.partial(_conv_stats_kernel, m_pix=m_pix),
        out_shape=(
            jax.ShapeDtypeStruct((n, cout, 1), jnp.float32),
            jax.ShapeDtypeStruct((n, cout, 1), jnp.float32),
        ),
        grid_spec=pltpu.PrefetchScalarGridSpec(
            num_scalar_prefetch=0,
            grid=grid,
            in_specs=[
                pl.BlockSpec((cout, k), lambda b, t: (0, 0)),
                pl.BlockSpec((None, k, tp), lambda b, t: (b, 0, t)),
            ],
            out_specs=[
                pl.BlockSpec((None, cout, 1), lambda b, t: (b, 0, 0)),
                pl.BlockSpec((None, cout, 1), lambda b, t: (b, 0, 0)),
            ],
        ),
        compiler_params=pltpu.CompilerParams(
            dimension_semantics=("parallel", "arbitrary"),
            vmem_limit_bytes=_VMEM_LIMIT_BYTES),
    )(w_mat, a)

    # ---- Tiny scalar glue: batch statistics -> folded BN scale / shift -----
    count = jnp.float32(n * m_pix)                    # true N*Ho*Wo pixel count
    mean = jnp.sum(sums, axis=0).reshape(cout) / count
    var = jnp.sum(sqs, axis=0).reshape(cout) / count - mean * mean
    var = jnp.maximum(var, 0.0)                       # guard one-pass cancellation
    inv_std = jax.lax.rsqrt(var + eps)
    scale = (gamma * inv_std).reshape(cout, 1).astype(jnp.float32)
    shift = (beta - mean * gamma * inv_std).reshape(cout, 1).astype(jnp.float32)

    # ---- Pass 2: recompute conv, fused BN affine + ReLU, NCHW-direct out ----
    out = pl.pallas_call(
        _conv_bn_relu_kernel,
        out_shape=jax.ShapeDtypeStruct((n, cout, m_pix), jnp.float32),
        grid_spec=pltpu.PrefetchScalarGridSpec(
            num_scalar_prefetch=0,
            grid=grid,
            in_specs=[
                pl.BlockSpec((cout, k), lambda b, t: (0, 0)),
                pl.BlockSpec((None, k, tp), lambda b, t: (b, 0, t)),
                pl.BlockSpec((cout, 1), lambda b, t: (0, 0)),
                pl.BlockSpec((cout, 1), lambda b, t: (0, 0)),
            ],
            out_specs=pl.BlockSpec((None, cout, tp), lambda b, t: (b, 0, t)),
        ),
        compiler_params=pltpu.CompilerParams(
            dimension_semantics=("parallel", "parallel"),
            vmem_limit_bytes=_VMEM_LIMIT_BYTES),
    )(w_mat, a, scale, shift)

    return out.reshape(n, cout, ho, wo)               # already NCHW; free reshape


# ---------------------------------------------------------------------------
# Parameter init (mirrors the PyTorch __init__) + driver
# ---------------------------------------------------------------------------
def init_params(key, in_planes, out_planes, kernel_size=1):
    fan = kernel_size * kernel_size * out_planes
    std = math.sqrt(2.0 / fan)
    w = std * jax.random.normal(
        key, (out_planes, in_planes, kernel_size, kernel_size), dtype=jnp.float32)
    gamma = jnp.ones((out_planes,), jnp.float32)
    beta = jnp.zeros((out_planes,), jnp.float32)
    return w, gamma, beta


if __name__ == "__main__":
    key = jax.random.PRNGKey(0)
    kx, kw_key = jax.random.split(key)

    N, Cin, H, W = 2, 4, 16, 16
    Cout, ksize, stride, padding = 8, 1, 1, 0

    x = jax.random.normal(kx, (N, Cin, H, W), dtype=jnp.float32)
    weight, gamma, beta = init_params(kw_key, Cin, Cout, ksize)

    out = conv_bn_relu(x, weight, gamma, beta, stride=stride, padding=padding)
    out = jax.block_until_ready(out)

    # Pure-JAX reference with the same bf16 matmul operands (f32 accumulate):
    # 1x1 conv == channel matmul, training-mode BN (biased var) + ReLU.
    a_ref = jnp.transpose(x, (0, 2, 3, 1)).reshape(-1, Cin).astype(jnp.bfloat16)
    w_ref = weight.reshape(Cout, Cin).astype(jnp.bfloat16)
    y_ref = jnp.dot(a_ref, w_ref.T, preferred_element_type=jnp.float32)
    mean_r = y_ref.mean(axis=0)
    var_r = y_ref.var(axis=0)
    ref = jnp.maximum(
        (y_ref - mean_r) * jax.lax.rsqrt(var_r + 1e-5) * gamma + beta, 0.0)
    ref = jnp.transpose(ref.reshape(N, H, W, Cout), (0, 3, 1, 2))

    assert out.shape == (N, Cout, H, W), out.shape
    assert jnp.allclose(out, ref, rtol=2e-3, atol=2e-3), (
        "mismatch vs reference, max abs err = "
        f"{float(jnp.max(jnp.abs(out - ref)))}")

    print("KERNEL_OK")
</pallas_src>

<mosaic_0001>
module attributes {stable_mosaic.version = 11 : i64} {
  func.func @_conv_stats_kernel(%arg0: i32, %arg1: i32, %arg2: memref<8x4xbf16, #tpu.memory_space<vmem>>, %arg3: memref<1x4x256xbf16, #tpu.memory_space<vmem>>, %arg4: memref<1x8x1xf32, #tpu.memory_space<vmem>>, %arg5: memref<1x8x1xf32, #tpu.memory_space<vmem>>) attributes {dimension_semantics = [#tpu.dimension_semantics<parallel>, #tpu.dimension_semantics<arbitrary>], iteration_bounds = array<i64: 2, 1>, scalar_prefetch = 0 : i64, scratch_operands = 0 : i64, tpu.core_type = #tpu.core_type<tc>, window_params = [{pipeline_mode = #tpu.pipeline_mode<synchronous>, transform_indices = @transform_0, window_bounds = array<i64: 8, 4>}, {transform_indices = @transform_1, window_bounds = array<i64: 1, 4, 256>}, {transform_indices = @transform_2, window_bounds = array<i64: 1, 8, 1>}, {transform_indices = @transform_3, window_bounds = array<i64: 1, 8, 1>}]} {
    %c0 = arith.constant 0 : index
    %c0_0 = arith.constant 0 : index
    %0 = vector.load %arg2[%c0, %c0_0] : memref<8x4xbf16, #tpu.memory_space<vmem>>, vector<8x4xbf16>
    %c0_1 = arith.constant 0 : index
    %c0_2 = arith.constant 0 : index
    %c0_3 = arith.constant 0 : index
    %1 = vector.load %arg3[%c0_1, %c0_2, %c0_3] : memref<1x4x256xbf16, #tpu.memory_space<vmem>>, vector<1x4x256xbf16>
    %2 = vector.shape_cast %1 : vector<1x4x256xbf16> to vector<4x256xbf16>
    %cst = arith.constant dense<0.000000e+00> : vector<8x256xf32>
    %3 = tpu.matmul %0, %2, %cst {dimension_numbers = #tpu.dot_dimension_numbers<[1], [0], [0], [1], [0, 0, 1, 1], [], []>} : vector<8x4xbf16>, vector<4x256xbf16>, vector<8x256xf32> -> vector<8x256xf32>
    %4 = tpu.iota {dimensions = array<i32: 1>} : vector<8x256xi32>
    %c256_i32 = arith.constant 256 : i32
    %5 = arith.muli %arg1, %c256_i32 : i32
    %6 = vector.broadcast %5 : i32 to vector<8x256xi32>
    %7 = arith.addi %4, %6 : vector<8x256xi32>
    %c256_i32_4 = arith.constant 256 : i32
    %8 = vector.broadcast %c256_i32_4 : i32 to vector<8x256xi32>
    %9 = arith.cmpi slt, %7, %8 : vector<8x256xi32>
    %cst_5 = arith.constant 0.000000e+00 : f32
    %10 = vector.broadcast %cst_5 : f32 to vector<8x256xf32>
    %11 = arith.select %9, %3, %10 : vector<8x256xi1>, vector<8x256xf32>
    %c0_i32 = arith.constant 0 : i32
    %12 = arith.cmpi eq, %arg1, %c0_i32 : i32
    %13 = arith.extui %12 : i1 to i32
    %c0_i32_6 = arith.constant 0 : i32
    %14 = arith.cmpi ne, %13, %c0_i32_6 : i32
    scf.if %14 {
      %cst_21 = arith.constant 0.000000e+00 : f32
      %32 = vector.broadcast %cst_21 : f32 to vector<8x1xf32>
      %c0_22 = arith.constant 0 : index
      %c0_23 = arith.constant 0 : index
      %c0_24 = arith.constant 0 : index
      %33 = vector.load %arg4[%c0_22, %c0_23, %c0_24] : memref<1x8x1xf32, #tpu.memory_space<vmem>>, vector<1x8x1xf32>
      %34 = vector.shape_cast %33 : vector<1x8x1xf32> to vector<8x1xf32>
      %35 = vector.shape_cast %32 : vector<8x1xf32> to vector<1x8x1xf32>
      tpu.vector_store %arg4[%c0_22, %c0_23, %c0_24], %35 {strides = array<i32>} : memref<1x8x1xf32, #tpu.memory_space<vmem>>, vector<1x8x1xf32>,
      %cst_25 = arith.constant 0.000000e+00 : f32
      %36 = vector.broadcast %cst_25 : f32 to vector<8x1xf32>
      %c0_26 = arith.constant 0 : index
      %c0_27 = arith.constant 0 : index
      %c0_28 = arith.constant 0 : index
      %37 = vector.load %arg5[%c0_26, %c0_27, %c0_28] : memref<1x8x1xf32, #tpu.memory_space<vmem>>, vector<1x8x1xf32>
      %38 = vector.shape_cast %37 : vector<1x8x1xf32> to vector<8x1xf32>
      %39 = vector.shape_cast %36 : vector<8x1xf32> to vector<1x8x1xf32>
      tpu.vector_store %arg5[%c0_26, %c0_27, %c0_28], %39 {strides = array<i32>} : memref<1x8x1xf32, #tpu.memory_space<vmem>>, vector<1x8x1xf32>,
    } else {
    }
    %c0_7 = arith.constant 0 : index
    %c0_8 = arith.constant 0 : index
    %c0_9 = arith.constant 0 : index
    %15 = vector.load %arg4[%c0_7, %c0_8, %c0_9] : memref<1x8x1xf32, #tpu.memory_space<vmem>>, vector<1x8x1xf32>
    %16 = vector.shape_cast %15 : vector<1x8x1xf32> to vector<8x1xf32>
    %cst_10 = arith.constant dense<0.000000e+00> : vector<8xf32>
    %17 = vector.multi_reduction <add>, %11, %cst_10 [1] : vector<8x256xf32> to vector<8xf32>
    %18 = vector.shape_cast %17 : vector<8xf32> to vector<8x1xf32>
    %19 = arith.addf %16, %18 : vector<8x1xf32>
    %c0_11 = arith.constant 0 : index
    %c0_12 = arith.constant 0 : index
    %c0_13 = arith.constant 0 : index
    %20 = vector.load %arg4[%c0_11, %c0_12, %c0_13] : memref<1x8x1xf32, #tpu.memory_space<vmem>>, vector<1x8x1xf32>
    %21 = vector.shape_cast %20 : vector<1x8x1xf32> to vector<8x1xf32>
    %22 = vector.shape_cast %19 : vector<8x1xf32> to vector<1x8x1xf32>
    tpu.vector_store %arg4[%c0_11, %c0_12, %c0_13], %22 {strides = array<i32>} : memref<1x8x1xf32, #tpu.memory_space<vmem>>, vector<1x8x1xf32>,
    %c0_14 = arith.constant 0 : index
    %c0_15 = arith.constant 0 : index
    %c0_16 = arith.constant 0 : index
    %23 = vector.load %arg5[%c0_14, %c0_15, %c0_16] : memref<1x8x1xf32, #tpu.memory_space<vmem>>, vector<1x8x1xf32>
    %24 = vector.shape_cast %23 : vector<1x8x1xf32> to vector<8x1xf32>
    %25 = arith.mulf %11, %11 : vector<8x256xf32>
    %cst_17 = arith.constant dense<0.000000e+00> : vector<8xf32>
    %26 = vector.multi_reduction <add>, %25, %cst_17 [1] : vector<8x256xf32> to vector<8xf32>
    %27 = vector.shape_cast %26 : vector<8xf32> to vector<8x1xf32>
    %28 = arith.addf %24, %27 : vector<8x1xf32>
    %c0_18 = arith.constant 0 : index
    %c0_19 = arith.constant 0 : index
    %c0_20 = arith.constant 0 : index
    %29 = vector.load %arg5[%c0_18, %c0_19, %c0_20] : memref<1x8x1xf32, #tpu.memory_space<vmem>>, vector<1x8x1xf32>
    %30 = vector.shape_cast %29 : vector<1x8x1xf32> to vector<8x1xf32>
    %31 = vector.shape_cast %28 : vector<8x1xf32> to vector<1x8x1xf32>
    tpu.vector_store %arg5[%c0_18, %c0_19, %c0_20], %31 {strides = array<i32>} : memref<1x8x1xf32, #tpu.memory_space<vmem>>, vector<1x8x1xf32>,
    return
  }
  func.func @transform_0(%arg0: i32, %arg1: i32) -> (i32, i32) {
    %c0_i32 = arith.constant 0 : i32
    %c0_i32_0 = arith.constant 0 : i32
    %c0_i32_1 = arith.constant 0 : i32
    return %c0_i32, %c0_i32_0 : i32, i32
  }
  func.func @transform_1(%arg0: i32, %arg1: i32) -> (i32, i32, i32) {
    %c0_i32 = arith.constant 0 : i32
    %c0_i32_0 = arith.constant 0 : i32
    return %arg0, %c0_i32, %arg1 : i32, i32, i32
  }
  func.func @transform_2(%arg0: i32, %arg1: i32) -> (i32, i32, i32) {
    %c0_i32 = arith.constant 0 : i32
    %c0_i32_0 = arith.constant 0 : i32
    %c0_i32_1 = arith.constant 0 : i32
    return %arg0, %c0_i32, %c0_i32_0 : i32, i32, i32
  }
  func.func @transform_3(%arg0: i32, %arg1: i32) -> (i32, i32, i32) {
    %c0_i32 = arith.constant 0 : i32
    %c0_i32_0 = arith.constant 0 : i32
    %c0_i32_1 = arith.constant 0 : i32
    return %arg0, %c0_i32, %c0_i32_0 : i32, i32, i32
  }
}

</mosaic_0001>

<llo_original>
// kernel: tpu_custom_call.1
$region0: #{tpu_custom_call.1}
  #allocation0 [shape = 'u32[]', space=smem, size = 0x4, offset = 0x4, fixed_abs, tag = 'smem constant byte address 0x4 - core index']
  #allocation1 [shape = 'u32[144,128]{1,0:T(1,128)}', space=vmem, size = 0x12000, scoped, tag = 'internal scratch']
  %s0 = inlined_call_operand.vmem [shape: bf16[8,4], index: 0, kind: input, shape index: {}]
  %s1 = inlined_call_operand.vmem [shape: bf16[2,4,256], index: 1, kind: input, shape index: {}]
  %s2 = inlined_call_operand.vmem [shape: f32[2,8,1], index: 2, kind: output, shape index: {0}]
  %s3 = inlined_call_operand.vmem [shape: f32[2,8,1], index: 3, kind: output, shape index: {1}]
  %4 = xla_tuple %s2, %s3
  %s5 = sld [smem:[#allocation0]]
  $region53: #{tpu_custom_call.1} parent=0
    _
  %s7 = ssub.s32 1, %s5
  %s8 = scalar_select 0, %s7, %s5
  loop: start=0, step=1, limit=4
  $region2: #{tpu_custom_call.1} parent=0 // loop_pre_header
    _
  $region3: #{tpu_custom_call.1} parent=0 // loop_header
    %s10 = sphi 0, %s14
    %p11 = scmp.ge.s32.totalorder %s10, 4
    %s17 = sphi 0, %s29
    %s18 = sphi 0, %s25
    %s19 = sphi 0, %s17
    %s20 = sphi 0, %s18
    %s21 = sphi 0, %s19
    %s22 = sphi 0, %s20
    %s30 = sphi 0, %s30
    %s32 = sphi 0, %s30
    %s33 = sphi 0, %s32
    %s47 = sphi 0, %s33
    %s55 = sphi 0, %s57
    %s58 = sphi 0, %s55
    %s59 = sphi 0, %s58
    %s75 = sphi 0, %s59
    %s81 = sphi 0, %s83
    %s84 = sphi 0, %s81
    %s85 = sphi 0, %s84
    %s101 = sphi 0, %s85
    %s107 = sphi 0, %s109
    %s110 = sphi 0, %s107
    %s111 = sphi 0, %s110
    %s127 = sphi 0, %s111
  $region4: #{tpu_custom_call.1} parent=0 // loop_header_branch
    %13 = sbr.rel (%p11) target = $region8
  $region5: #{tpu_custom_call.1} parent=0 // loop_body
    %s15 = ssub.s32 %s10, 1
    %s16 = ssub.s32 %s10, 2
    %s23 = sadd.s32 1, %s18
    %p24 = scmp.ge.s32.totalorder %s23, 1
    %s25 = scalar_select %p24, 0, %s23
    %s26 = sadd.s32 1, %s17
    %s27 = scalar_select %p24, %s26, %s17
    %p28 = scmp.ge.s32.totalorder %s27, 2
    %s29 = scalar_select %p28, 0, %s27
    %s31 = sadd.s32 %s30, 1
    %p34 = scmp.eq.s32.totalorder %s10, 1
    %p35 = scmp.ne.s32.totalorder %s30, %s32
    %p36 = scmp.eq.s32.totalorder %s10, 0
    %p37 = por %p35, %p36
    %p38 = scmp.ne.s32.totalorder %s30, %s32
    %p39 = scmp.eq.s32.totalorder %s15, 1
    %p40 = por %p38, %p39
    %p41 = scmp.ne.s32.totalorder %s32, %s33
    %p42 = scmp.eq.s32.totalorder %s15, 0
    %p43 = por %p41, %p42
    %p44 = scmp.ne.s32.totalorder %s32, %s33
    %p45 = scmp.eq.s32.totalorder %s16, 1
    %p46 = por %p44, %p45
    %p48 = scmp.ne.s32.totalorder %s33, %s47
    %p49 = scmp.eq.s32.totalorder %s16, 0
    %p50 = por %p48, %p49
    %s51 = ssub.s32 %s17, %s29
    %s52 = ssub.s32 %s18, %s25
    %s53 = sor.u32 %s51, %s52
    %p54 = scmp.eq.s32.totalorder %s53, 0
    %s56 = sadd.s32 %s55, 1
    %s57 = scalar_select %p54, %s55, %s56
    %p60 = pneg %p54
    %p61 = scmp.eq.s32.totalorder %s10, 1
    %p62 = por %p60, %p61
    %p63 = scmp.ne.s32.totalorder %s55, %s58
    %p64 = scmp.eq.s32.totalorder %s10, 0
    %p65 = por %p63, %p64
    %p66 = scmp.ne.s32.totalorder %s55, %s58
    %p67 = scmp.eq.s32.totalorder %s15, 1
    %p68 = por %p66, %p67
    %p69 = scmp.ne.s32.totalorder %s58, %s59
    %p70 = scmp.eq.s32.totalorder %s15, 0
    %p71 = por %p69, %p70
    %p72 = scmp.ne.s32.totalorder %s58, %s59
    %p73 = scmp.eq.s32.totalorder %s16, 1
    %p74 = por %p72, %p73
    %p76 = scmp.ne.s32.totalorder %s59, %s75
    %p77 = scmp.eq.s32.totalorder %s16, 0
    %p78 = por %p76, %p77
    %s79 = ssub.s32 %s17, %s29
    %p80 = scmp.eq.s32.totalorder %s79, 0
    %s82 = sadd.s32 %s81, 1
    %s83 = scalar_select %p80, %s81, %s82
    %p86 = pneg %p80
    %p87 = scmp.eq.s32.totalorder %s10, 1
    %p88 = por %p86, %p87
    %p89 = scmp.ne.s32.totalorder %s81, %s84
    %p90 = scmp.eq.s32.totalorder %s10, 0
    %p91 = por %p89, %p90
    %p92 = scmp.ne.s32.totalorder %s81, %s84
    %p93 = scmp.eq.s32.totalorder %s15, 1
    %p94 = por %p92, %p93
    %p95 = scmp.ne.s32.totalorder %s84, %s85
    %p96 = scmp.eq.s32.totalorder %s15, 0
    %p97 = por %p95, %p96
    %p98 = scmp.ne.s32.totalorder %s84, %s85
    %p99 = scmp.eq.s32.totalorder %s16, 1
    %p100 = por %p98, %p99
    %p102 = scmp.ne.s32.totalorder %s85, %s101
    %p103 = scmp.eq.s32.totalorder %s16, 0
    %p104 = por %p102, %p103
    %s105 = ssub.s32 %s17, %s29
    %p106 = scmp.eq.s32.totalorder %s105, 0
    %s108 = sadd.s32 %s107, 1
    %s109 = scalar_select %p106, %s107, %s108
    %p112 = pneg %p106
    %p113 = scmp.eq.s32.totalorder %s10, 1
    %p114 = por %p112, %p113
    %p115 = scmp.ne.s32.totalorder %s107, %s110
    %p116 = scmp.eq.s32.totalorder %s10, 0
    %p117 = por %p115, %p116
    %p118 = scmp.ne.s32.totalorder %s107, %s110
    %p119 = scmp.eq.s32.totalorder %s15, 1
    %p120 = por %p118, %p119
    %p121 = scmp.ne.s32.totalorder %s110, %s111
    %p122 = scmp.eq.s32.totalorder %s15, 0
    %p123 = por %p121, %p122
    %p124 = scmp.ne.s32.totalorder %s110, %s111
    %p125 = scmp.eq.s32.totalorder %s16, 1
    %p126 = por %p124, %p125
    %p128 = scmp.ne.s32.totalorder %s111, %s127
    %p129 = scmp.eq.s32.totalorder %s16, 0
    %p130 = por %p128, %p129
    %p131 = scmp.le.s32.totalorder 1, %s10
    %p132 = scmp.lt.s32.totalorder %s10, 3
    %p133 = pnand %p131, %p132
    %p134 = pneg %p133
    // Predicated region
    $region9: #{tpu_custom_call.1} parent=5 // pred_check
      _
    $region10: #{tpu_custom_call.1} parent=5 // pred_check_branch
      %136 = sbr.rel (%p133) target = $region12
    $region11: #{tpu_custom_call.1} parent=5 // pred_region
      %s137 = ssub.s32 %s10, 1
      // Predicated region
      $region13: #{tpu_custom_call.1} parent=11 // pred_check
        %p138 = pneg %p43
      $region14: #{tpu_custom_call.1} parent=11 // pred_check_branch
        %140 = sbr.rel (%p138) target = $region16
      $region15: #{tpu_custom_call.1} parent=11 // pred_region
        _
      $region16: #{tpu_custom_call.1} parent=11 // pred_fallthru
        _
    $region12: #{tpu_custom_call.1} parent=5 // pred_fallthru
      _
    %p141 = scmp.lt.s32.totalorder %s10, 2
    // Predicated region
    $region17: #{tpu_custom_call.1} parent=5 // pred_check
      %p142 = pneg %p141
    $region18: #{tpu_custom_call.1} parent=5 // pred_check_branch
      %144 = sbr.rel (%p142) target = $region20
    $region19: #{tpu_custom_call.1} parent=5 // pred_region
      // Predicated region
      $region21: #{tpu_custom_call.1} parent=19 // pred_check
        %p145 = pneg %p65
      $region22: #{tpu_custom_call.1} parent=19 // pred_check_branch
        %147 = sbr.rel (%p145) target = $region24
      $region23: #{tpu_custom_call.1} parent=19 // pred_region
        %s148 = smul.u32 2, %s18
        %p149 = scmp.lt.s32.totalorder %s17, 1
        %s150 = scalar_select %p149, %s17, 1
        %p151 = scmp.lt.s32.totalorder %s148, 1
        %s152 = scalar_select %p151, %s148, 1
        %s153 = smul.addr %s150, 2
        %s154 = sadd.s32 %s152, %s153
        %s155 = smul.addr %s154, 2
        %s156 = scalar_lea.vmem %s1, %s155
        %s157 = smul.u32 2, %s18
      $region24: #{tpu_custom_call.1} parent=19 // pred_fallthru
        _
    $region20: #{tpu_custom_call.1} parent=5 // pred_fallthru
      _
    %p158 = scmp.le.s32.totalorder 1, %s10
    %p159 = scmp.lt.s32.totalorder %s10, 3
    %p160 = pnand %p158, %p159
    %p161 = pneg %p160
    // Predicated region
    $region25: #{tpu_custom_call.1} parent=5 // pred_check
      _
    $region26: #{tpu_custom_call.1} parent=5 // pred_check_branch
      %163 = sbr.rel (%p160) target = $region28
    $region27: #{tpu_custom_call.1} parent=5 // pred_region
      %s164 = ssub.s32 %s10, 1
      %p165 = pneg %p43
      %p166 = pneg %p40
      %s167 = smul.u32 2, %s20
      %p168 = scmp.lt.s32.totalorder %s19, 1
      %s169 = scalar_select %p168, %s19, 1
      %p170 = scmp.lt.s32.totalorder %s167, 1
      %s171 = scalar_select %p170, %s167, 1
      %s172 = smul.addr %s169, 2
      %s173 = sadd.s32 %s171, %s172
      %s174 = smul.addr %s173, 2
      %s175 = scalar_lea.vmem %s1, %s174
      %p176 = pneg %p71
      %p177 = pneg %p68
      %p178 = pneg %p97
      %p179 = pneg %p94
      %p180 = scmp.lt.s32.totalorder %s19, 1
      %s181 = scalar_select %p180, %s19, 1
      %s182 = smul.addr %s181, 8
      %s183 = scalar_lea.vmem %s2, %s182
      %p184 = pneg %p123
      %p185 = pneg %p120
      %p186 = scmp.lt.s32.totalorder %s19, 1
      %s187 = scalar_select %p186, %s19, 1
      %s188 = smul.addr %s187, 8
      %s189 = scalar_lea.vmem %s3, %s188
      %s190 = smul.u32 2, %s20
      %p191 = scmp.lt.s32.totalorder %s19, 1
      %s192 = scalar_select %p191, %s19, 1
      %p193 = scmp.lt.s32.totalorder %s190, 1
      %s194 = scalar_select %p193, %s190, 1
      %s195 = smul.addr %s192, 2
      %s196 = sadd.s32 %s194, %s195
      %s197 = smul.addr %s196, 2
      %s198 = scalar_lea.vmem %s1, %s197
      %s199 = smul.u32 2, %s20
      %p200 = scmp.lt.s32.totalorder %s19, 1
      %s201 = scalar_select %p200, %s19, 1
      %s202 = smul.addr %s201, 8
      %s203 = scalar_lea.vmem %s2, %s202
      %p204 = scmp.lt.s32.totalorder %s19, 1
      %s205 = scalar_select %p204, %s19, 1
      %s206 = smul.addr %s205, 8
      %s207 = scalar_lea.vmem %s3, %s206
      %v209 = vld [vmem:[%s0] sm:$0xf]
      %v210 = vld [vmem:[%s198] sm:$0xf]
      %v213 = vunpack.c.l.s4 1983009808
      %v214 = vunpack.c.0.s8 %v213
      %v215 = vlaneseq
      %v216 = vshrl.u32 %v215, 7
      %v217 = vsub.s32 %v214, %v216
      %v218 = vrot.slane %v210, %v217
      %v219 = vcombine.high %v218, %v218
      %vm220 = vcmask 31744
      %v222 = vsel %vm220, %v209, 0
      %vm224 = vcmask 1041408
      %v226 = vsel %vm224, %v218, 0
      %v229 = vsel %vm224, %v219, 0
      %231 = vmatprep.subr.bf16.mxu0 %v229
      %232 = vmatpush1.bf16.msra.mxu0 %v226
      %233 = vmatprep.subr.bf16.mxu0 0
      %234 = vmatpush1.bf16.msra.mxu0 0
      %235 = vmatprep.subr.bf16.mxu0 0
      %236 = vmatpush1.bf16.msra.mxu0 0
      %237 = vmatprep.subr.bf16.mxu0 0
      %238 = vmatpush1.bf16.msra.mxu0 0
      %239 = vmatprep.subr.bf16.mxu0 0
      %240 = vmatpush1.bf16.msra.mxu0 0
      %241 = vmatprep.subr.bf16.mxu0 0
      %242 = vmatpush1.bf16.msra.mxu0 0
      %243 = vmatprep.subr.bf16.mxu0 0
      %244 = vmatpush1.bf16.msra.mxu0 0
      %245 = vmatprep.subr.bf16.mxu0 0
      %246 = vmatpush1.bf16.msra.mxu0 0
      %247 = vmatprep.subr.bf16.mxu0 0
      %248 = vmatpush1.bf16.msra.mxu0 0
      %249 = vmatprep.subr.bf16.mxu0 0
      %250 = vmatpush1.bf16.msra.mxu0 0
      %251 = vmatprep.subr.bf16.mxu0 0
      %252 = vmatpush1.bf16.msra.mxu0 0
      %253 = vmatprep.subr.bf16.mxu0 0
      %254 = vmatpush1.bf16.msra.mxu0 0
      %255 = vmatprep.subr.bf16.mxu0 0
      %256 = vmatpush1.bf16.msra.mxu0 0
      %257 = vmatprep.subr.bf16.mxu0 0
      %258 = vmatpush1.bf16.msra.mxu0 0
      %259 = vmatprep.subr.bf16.mxu0 0
      %260 = vmatpush1.bf16.msra.mxu0 0
      %261 = vmatprep.subr.bf16.mxu0 0
      %262 = vmatpush1.bf16.msra.mxu0 0
      %263 = vmatprep.mubr.bf16.mxu0 0
      %264 = vmatmul.mubr.bf16.gmra.mrb[0].mxu0 %v222
      %v265 = vpop.f32.mrb[0].mxu0
      %v266 = vadd.f32 0.0, %v265
      %v267 = vpop.f32.mrb[0].mxu0
      %v268 = vadd.f32 0.0, %v267
      %v269 = vpop.f32.mrb[0].mxu0
      %v270 = vpop.f32.mrb[0].mxu0
      %271 = vdwg.mxu0
      %v272 = vlaneseq
      %v273 = vand.u32 %v272, 127
      %v274 = vadd.s32 %v273, 128
      %s275 = smul.u32 %s20, 256
      %v276 = vstv %s275
      %v277 = vadd.s32 %v273, %v276
      %v278 = vadd.s32 %v274, %v276
      %vm279 = vcmp.lt.s32.totalorder %v277, 256
      %vm280 = vcmp.lt.s32.totalorder %v278, 256
      %v281 = vsel %vm279, %v266, 0.0
      %v282 = vsel %vm280, %v268, 0.0
      %p283 = scmp.eq.s32.totalorder %s20, 0
      // Predicated region
      $region29: #{tpu_custom_call.1} parent=27 // pred_check
        %p284 = pneg %p283
      $region30: #{tpu_custom_call.1} parent=27 // pred_check_branch
        %286 = sbr.rel (%p284) target = $region32
      $region31: #{tpu_custom_call.1} parent=27 // pred_region
        %vm287 = vcmask 7168
        %288 = vst.msk [vmem:[%s203] sm:$0xff] %vm287, 0.0
        %289 = vst.msk [vmem:[%s207] sm:$0xff] %vm287, 0.0
      $region32: #{tpu_custom_call.1} parent=27 // pred_fallthru
        _
      %v290 = vld [vmem:[%s203] sm:$0xff]
      %v291 = vadd.f32 %v281, %v282
      %292 = vadd.xlane.f32.xlu0 %v291
      %v293 = vpop.xlane.xlu0 %292
      %v294 = vadd.f32 %v290, %v293
      %vm295 = vcmask 7168
      %296 = vst.msk [vmem:[%s203] sm:$0xff] %vm295, %v294
      %v297 = vld [vmem:[%s207] sm:$0xff]
      %v298 = vmul.f32 %v281, %v281
      %v299 = vmul.f32 %v282, %v282
      %v300 = vadd.f32 %v298, %v299
      %301 = vadd.xlane.f32.xlu0 %v300
      %v302 = vpop.xlane.xlu0 %301
      %v303 = vadd.f32 %v297, %v302
      %304 = vst.msk [vmem:[%s207] sm:$0xff] %vm295, %v303
      %p305 = scmp.lt.s32.totalorder %s19, 1
      %s306 = scalar_select %p305, %s19, 1
      %s307 = smul.addr %s306, 8
      %s308 = scalar_lea.vmem %s2, %s307
      %p309 = scmp.lt.s32.totalorder %s19, 1
      %s310 = scalar_select %p309, %s19, 1
      %s311 = smul.addr %s310, 8
      %s312 = scalar_lea.vmem %s3, %s311
      // Predicated region
      $region33: #{tpu_custom_call.1} parent=27 // pred_check
        %p313 = pneg %p94
      $region34: #{tpu_custom_call.1} parent=27 // pred_check_branch
        %315 = sbr.rel (%p313) target = $region36
      $region35: #{tpu_custom_call.1} parent=27 // pred_region
        _
      $region36: #{tpu_custom_call.1} parent=27 // pred_fallthru
        _
      // Predicated region
      $region37: #{tpu_custom_call.1} parent=27 // pred_check
        %p316 = pneg %p120
      $region38: #{tpu_custom_call.1} parent=27 // pred_check_branch
        %318 = sbr.rel (%p316) target = $region40
      $region39: #{tpu_custom_call.1} parent=27 // pred_region
        _
      $region40: #{tpu_custom_call.1} parent=27 // pred_fallthru
        _
    $region28: #{tpu_custom_call.1} parent=5 // pred_fallthru
      _
    %p319 = scmp.le.s32.totalorder 2, %s10
    // Predicated region
    $region41: #{tpu_custom_call.1} parent=5 // pred_check
      %p320 = pneg %p319
    $region42: #{tpu_custom_call.1} parent=5 // pred_check_branch
      %322 = sbr.rel (%p320) target = $region44
    $region43: #{tpu_custom_call.1} parent=5 // pred_region
      %s323 = ssub.s32 %s10, 2
      // Predicated region
      $region45: #{tpu_custom_call.1} parent=43 // pred_check
        %p324 = pneg %p100
      $region46: #{tpu_custom_call.1} parent=43 // pred_check_branch
        %326 = sbr.rel (%p324) target = $region48
      $region47: #{tpu_custom_call.1} parent=43 // pred_region
        %p327 = scmp.lt.s32.totalorder %s21, 1
        %s328 = scalar_select %p327, %s21, 1
        %s329 = smul.addr %s328, 8
        %s330 = scalar_lea.vmem %s2, %s329
      $region48: #{tpu_custom_call.1} parent=43 // pred_fallthru
        _
      // Predicated region
      $region49: #{tpu_custom_call.1} parent=43 // pred_check
        %p331 = pneg %p126
      $region50: #{tpu_custom_call.1} parent=43 // pred_check_branch
        %333 = sbr.rel (%p331) target = $region52
      $region51: #{tpu_custom_call.1} parent=43 // pred_region
        %p334 = scmp.lt.s32.totalorder %s21, 1
        %s335 = scalar_select %p334, %s21, 1
        %s336 = smul.addr %s335, 8
        %s337 = scalar_lea.vmem %s3, %s336
      $region52: #{tpu_custom_call.1} parent=43 // pred_fallthru
        _
    $region44: #{tpu_custom_call.1} parent=5 // pred_fallthru
      _
  $region6: #{tpu_custom_call.1} parent=0 // loop_footer
    %s14 = sadd.s32 1, %s10
  $region7: #{tpu_custom_call.1} parent=0 // loop_footer_branch
    %9 = sbr.rel target = $region3
  $region8: #{tpu_custom_call.1} parent=0 // loop_exit
    _

</llo_original>
